<compile_context>
chip_gen: v5e
topology: v5e:2x2
jax: 0.10.0
libtpu: 0.0.40
codegen_flags: <defaults>
</compile_context>

<pallas_src>
import jax
import jax.numpy as jnp
from jax.experimental import pallas as pl
from jax.experimental.pallas import tpu as pltpu

LN_EPS = 1e-5


def cls_head_kernel(x_ref, w_ref, b_ref, out_ref, acc_ref):
    # x_ref:   (Nb, C, TP)   features: channels on sublanes, spatial on lanes
    # w_ref:   (C, Kp)       fc weight^T with LN gamma and 1/P folded in (lane-padded)
    # b_ref:   (1, Kp)       fc bias with the LN beta term folded in (lane-padded)
    # out_ref: (Nb, Kp)      logits for this batch block
    # acc_ref: (Nb, C, 128)  lane-shaped running spatial sum of normalized features
    p = pl.program_id(1)

    @pl.when(p == 0)
    def _init():
        acc_ref[...] = jnp.zeros_like(acc_ref)

    x = x_ref[...].astype(jnp.float32)                        # (Nb, C, TP)
    inv_c = 1.0 / x.shape[1]
    # Per-pixel LayerNorm over the channel (sublane) axis; two-pass moments for stability.
    mean = jnp.sum(x, axis=1, keepdims=True) * inv_c          # (Nb, 1, TP)
    xc = x - mean
    var = jnp.sum(xc * xc, axis=1, keepdims=True) * inv_c     # (Nb, 1, TP)
    xn = xc * jax.lax.rsqrt(var + LN_EPS)                     # (Nb, C, TP); affine folded into fc

    # Lane-shaped spatial accumulation: 128-aligned static slices are free vreg selections and
    # the adds are pure VPU work -> no per-tile XLU lane-reduce / (Nb, C) relayout.
    acc = acc_ref[...]
    for j in range(x.shape[2] // 128):
        acc = acc + xn[:, :, j * 128:(j + 1) * 128]
    acc_ref[...] = acc

    @pl.when(p == pl.num_programs(1) - 1)
    def _finalize():
        # One cross-lane reduce per batch block, then one real MXU matmul.
        pooled = jnp.sum(acc_ref[...], axis=-1)               # (Nb, C)
        logits = jnp.dot(pooled, w_ref[...],
                         preferred_element_type=jnp.float32) + b_ref[...]
        out_ref[...] = logits.astype(out_ref.dtype)


def _round_up(a, m):
    return -(-a // m) * m


def _tpu_device_kind():
    """Best-effort device-kind sniff; never raises."""
    try:
        return jax.devices()[0].device_kind.lower()
    except Exception:
        return ""


def _pick_spatial_tiling(p, bytes_per_position, budget_bytes, max_lanes=4096):
    """Return (TP, P_padded): TP is a multiple of 128 lanes fitting the byte budget,
    P_padded is a multiple of TP.  Zero spatial padding is numerically exact for this head."""
    p128 = _round_up(p, 128)
    by_budget = (budget_bytes // max(bytes_per_position, 1)) // 128 * 128
    max_tp = max(128, min(p128, max_lanes, by_budget))
    if p % 128 == 0:
        # Prefer a divisor of P: no spatial zero-padding / extra HBM copy needed.
        divs = [d for d in range(128, p + 1, 128) if p % d == 0 and d <= max_tp]
        if divs:
            return max(divs), p
    return max_tp, _round_up(p, max_tp)


def cls_head_forward(x_nchw, gamma, beta, fc_weight, fc_bias, *, batch_block=8):
    """x_nchw: (N, C, H, W) in f32 or bf16. Returns logits (N, num_classes), float32."""
    N, C, H, W = x_nchw.shape
    K = fc_weight.shape[0]
    P = H * W

    kind = _tpu_device_kind()
    two_tensorcores = "v7" in kind                       # v7x: 2 TCs/chip share the grid
    if ("v5" in kind) or ("v6" in kind):
        x_tile_budget = 8 << 20                           # 128 MiB VMEM: bigger spatial tiles
        vmem_limit = 64 << 20
    else:                                                 # v7x (64 MiB VMEM) / unknown: conservative
        x_tile_budget = 4 << 20
        vmem_limit = 32 << 20

    # Fold LN affine + 1/P pooling into the fc parameters (uses the TRUE P, so the spatial
    # zero-padding below stays exact):
    #   logits = mean_P(xhat*gamma + beta) @ W.T + b
    #          = sum_P(xhat) @ (diag(gamma) @ W.T / P) + (beta @ W.T + b)
    w_folded = (gamma[:, None] * fc_weight.T).astype(jnp.float32) / float(P)   # (C, K)
    b_folded = (beta @ fc_weight.T + fc_bias).astype(jnp.float32)              # (K,)

    # Lane-dense output store: pad the class dim to a multiple of 128, slice after the kernel.
    Kp = _round_up(K, 128)
    w_p = jnp.pad(w_folded, ((0, 0), (0, Kp - K)))
    b_p = jnp.pad(b_folded, (0, Kp - K)).reshape(1, Kp)

    # Batch block: pad N up instead of shrinking the block for awkward N, but on 2-TC chips keep
    # at least 2 batch grid steps so the "parallel" axis can be sharded across both TensorCores.
    Nb = min(batch_block, N)
    if two_tensorcores and N >= 2:
        Nb = min(Nb, (N + 1) // 2)
    while Nb > 1 and Nb * C * 128 * 4 > (8 << 20):        # keep the lane-shaped acc in budget
        Nb //= 2
    Np = _round_up(N, Nb)

    # Spatial tile: a multiple of 128 lanes targeting the per-generation byte budget.
    TP, Pp = _pick_spatial_tiling(P, Nb * C * x_nchw.dtype.itemsize, x_tile_budget)

    # Free reshape (no transpose): (N, C, H, W) -> (N, C, P).  Keep the caller's dtype; the
    # kernel upcasts in-register, so bf16 features halve HBM traffic on v5e/v6e.
    x = x_nchw.reshape(N, C, P)
    if Np != N or Pp != P:
        x = jnp.pad(x, ((0, Np - N), (0, 0), (0, Pp - P)))

    grid = (Np // Nb, Pp // TP)

    def _run(single_buffer_weights):
        if single_buffer_weights:
            # Constant index_map -> a second pipeline buffer for w/b is pure VMEM waste.
            const_kwargs = dict(pipeline_mode=pl.Buffered(1))
        else:
            const_kwargs = {}
        grid_spec = pltpu.PrefetchScalarGridSpec(
            num_scalar_prefetch=0,
            grid=grid,
            in_specs=[
                pl.BlockSpec((Nb, C, TP), lambda n, p: (n, 0, p)),      # feature tile
                pl.BlockSpec((C, Kp), lambda n, p: (0, 0), **const_kwargs),   # folded fc W^T
                pl.BlockSpec((1, Kp), lambda n, p: (0, 0), **const_kwargs),   # folded fc bias
            ],
            out_specs=pl.BlockSpec((Nb, Kp), lambda n, p: (n, 0)),
            scratch_shapes=[pltpu.VMEM((Nb, C, 128), jnp.float32)],
        )
        return pl.pallas_call(
            cls_head_kernel,
            out_shape=jax.ShapeDtypeStruct((Np, Kp), jnp.float32),
            grid_spec=grid_spec,
            compiler_params=pltpu.CompilerParams(
                dimension_semantics=("parallel", "arbitrary"),
                vmem_limit_bytes=vmem_limit,
            ),
        )(x, w_p, b_p)

    try:
        out = _run(True)
    except Exception:
        # Fallback for jax versions without single-buffer pipeline_mode support; identical
        # kernel, the constant weight/bias operands just get the default double buffer.
        out = _run(False)

    return out[:N, :K]


def reference_forward(x_nchw, gamma, beta, fc_weight, fc_bias):
    """Pure-JAX reference mirroring the PyTorch module exactly (no folding)."""
    x = jnp.transpose(x_nchw, (0, 2, 3, 1))                         # NHWC
    mean = jnp.mean(x, axis=-1, keepdims=True)
    var = jnp.mean((x - mean) ** 2, axis=-1, keepdims=True)
    xn = (x - mean) / jnp.sqrt(var + LN_EPS)
    xn = xn * gamma + beta
    feat = jnp.mean(xn, axis=(1, 2))                                # (N, C)
    return feat @ fc_weight.T + fc_bias


if __name__ == "__main__":
    # ClsHead(in_channels=(8, 16, 32), num_classes=10) -> consumes only the last feature map.
    in_channels = (8, 16, 32)
    num_classes = 10
    N, H, W = 2, 16, 16
    C = in_channels[-1]

    key = jax.random.PRNGKey(0)
    k_x, k_g, k_b, k_w, k_fb = jax.random.split(key, 5)

    # Synthetic multi-scale feature list; only the last one is consumed by the head.
    feats = [
        jax.random.normal(jax.random.fold_in(k_x, i),
                          (N, c, H // (2 ** (len(in_channels) - 1 - i)),
                           W // (2 ** (len(in_channels) - 1 - i))),
                          dtype=jnp.float32)
        for i, c in enumerate(in_channels)
    ]
    x_last = feats[-1]                                              # (2, 32, 16, 16)

    # Deterministic synthetic parameters (shapes follow the module __init__).
    gamma = 1.0 + 0.01 * jax.random.normal(k_g, (C,), dtype=jnp.float32)
    beta = 0.01 * jax.random.normal(k_b, (C,), dtype=jnp.float32)
    fc_weight = 0.05 * jax.random.normal(k_w, (num_classes, C), dtype=jnp.float32)
    fc_bias = 0.05 * jax.random.normal(k_fb, (num_classes,), dtype=jnp.float32)

    # TODO(synk): dropout_ratio > 0 (training-mode nn.Dropout) is not implemented; the module
    # default (0.0 -> nn.Identity) is what this forward pass models.

    # float32 path
    logits = cls_head_forward(x_last, gamma, beta, fc_weight, fc_bias)
    logits = jax.block_until_ready(logits)
    ref = reference_forward(x_last, gamma, beta, fc_weight, fc_bias)
    assert logits.shape == (N, num_classes)
    assert jnp.allclose(logits, ref, atol=1e-4, rtol=1e-4), (
        f"f32 max err {jnp.max(jnp.abs(logits - ref))}")

    # bfloat16 feature path (no f32 copy materialized at the pallas_call boundary).
    x_bf16 = x_last.astype(jnp.bfloat16)
    logits_bf16 = cls_head_forward(x_bf16, gamma, beta, fc_weight, fc_bias)
    logits_bf16 = jax.block_until_ready(logits_bf16)
    ref_bf16 = reference_forward(x_bf16.astype(jnp.float32), gamma, beta, fc_weight, fc_bias)
    assert jnp.allclose(logits_bf16, ref_bf16, atol=1e-3, rtol=1e-3), (
        f"bf16 max err {jnp.max(jnp.abs(logits_bf16 - ref_bf16))}")

    print("KERNEL_OK")
</pallas_src>

<mosaic_0001>
module attributes {stable_mosaic.version = 11 : i64} {
  func.func @cls_head_kernel(%arg0: i32, %arg1: i32, %arg2: memref<2x32x256xf32, #tpu.memory_space<vmem>>, %arg3: memref<32x128xf32, #tpu.memory_space<vmem>>, %arg4: memref<1x128xf32, #tpu.memory_space<vmem>>, %arg5: memref<2x128xf32, #tpu.memory_space<vmem>>, %arg6: memref<2x32x128xf32, #tpu.memory_space<vmem>>) attributes {dimension_semantics = [#tpu.dimension_semantics<parallel>, #tpu.dimension_semantics<arbitrary>], iteration_bounds = array<i64: 1, 1>, scalar_prefetch = 0 : i64, scratch_operands = 1 : i64, tpu.core_type = #tpu.core_type<tc>, window_params = [{transform_indices = @transform_0, window_bounds = array<i64: 2, 32, 256>}, {pipeline_mode = #tpu.pipeline_mode<synchronous>, transform_indices = @transform_1, window_bounds = array<i64: 32, 128>}, {pipeline_mode = #tpu.pipeline_mode<synchronous>, transform_indices = @transform_2, window_bounds = array<i64: 1, 128>}, {transform_indices = @transform_3, window_bounds = array<i64: 2, 128>}]} {
    %c0_i32 = arith.constant 0 : i32
    %0 = arith.cmpi eq, %arg1, %c0_i32 : i32
    %1 = arith.extui %0 : i1 to i32
    %c0_i32_0 = arith.constant 0 : i32
    %2 = arith.cmpi ne, %1, %c0_i32_0 : i32
    scf.if %2 {
      %cst_15 = arith.constant 0.000000e+00 : f32
      %29 = vector.broadcast %cst_15 : f32 to vector<2x32x128xf32>
      %c0_16 = arith.constant 0 : index
      %c0_17 = arith.constant 0 : index
      %c0_18 = arith.constant 0 : index
      %30 = vector.load %arg6[%c0_16, %c0_17, %c0_18] : memref<2x32x128xf32, #tpu.memory_space<vmem>>, vector<2x32x128xf32>
      tpu.vector_store %arg6[%c0_16, %c0_17, %c0_18], %29 {strides = array<i32>} : memref<2x32x128xf32, #tpu.memory_space<vmem>>, vector<2x32x128xf32>,
    } else {
    }
    %c0 = arith.constant 0 : index
    %c0_1 = arith.constant 0 : index
    %c0_2 = arith.constant 0 : index
    %3 = vector.load %arg2[%c0, %c0_1, %c0_2] : memref<2x32x256xf32, #tpu.memory_space<vmem>>, vector<2x32x256xf32>
    %cst = arith.constant dense<0.000000e+00> : vector<2x256xf32>
    %4 = vector.multi_reduction <add>, %3, %cst [1] : vector<2x32x256xf32> to vector<2x256xf32>
    %5 = vector.shape_cast %4 : vector<2x256xf32> to vector<2x1x256xf32>
    %cst_3 = arith.constant 3.125000e-02 : f32
    %6 = vector.broadcast %cst_3 : f32 to vector<2x1x256xf32>
    %7 = arith.mulf %5, %6 : vector<2x1x256xf32>
    %8 = vector.broadcast %7 : vector<2x1x256xf32> to vector<2x32x256xf32>
    %9 = arith.subf %3, %8 : vector<2x32x256xf32>
    %10 = arith.mulf %9, %9 : vector<2x32x256xf32>
    %cst_4 = arith.constant dense<0.000000e+00> : vector<2x256xf32>
    %11 = vector.multi_reduction <add>, %10, %cst_4 [1] : vector<2x32x256xf32> to vector<2x256xf32>
    %12 = vector.shape_cast %11 : vector<2x256xf32> to vector<2x1x256xf32>
    %cst_5 = arith.constant 3.125000e-02 : f32
    %13 = vector.broadcast %cst_5 : f32 to vector<2x1x256xf32>
    %14 = arith.mulf %12, %13 : vector<2x1x256xf32>
    %cst_6 = arith.constant 9.99999974E-6 : f32
    %15 = vector.broadcast %cst_6 : f32 to vector<2x1x256xf32>
    %16 = arith.addf %14, %15 : vector<2x1x256xf32>
    %17 = math.rsqrt %16 : vector<2x1x256xf32>
    %18 = vector.broadcast %17 : vector<2x1x256xf32> to vector<2x32x256xf32>
    %19 = arith.mulf %9, %18 : vector<2x32x256xf32>
    %c0_7 = arith.constant 0 : index
    %c0_8 = arith.constant 0 : index
    %c0_9 = arith.constant 0 : index
    %20 = vector.load %arg6[%c0_7, %c0_8, %c0_9] : memref<2x32x128xf32, #tpu.memory_space<vmem>>, vector<2x32x128xf32>
    %21 = vector.extract_strided_slice %19 {offsets = [0, 0, 0], sizes = [2, 32, 128], strides = [1, 1, 1]} : vector<2x32x256xf32> to vector<2x32x128xf32>
    %22 = arith.addf %20, %21 : vector<2x32x128xf32>
    %23 = vector.extract_strided_slice %19 {offsets = [0, 0, 128], sizes = [2, 32, 128], strides = [1, 1, 1]} : vector<2x32x256xf32> to vector<2x32x128xf32>
    %24 = arith.addf %22, %23 : vector<2x32x128xf32>
    %c0_10 = arith.constant 0 : index
    %c0_11 = arith.constant 0 : index
    %c0_12 = arith.constant 0 : index
    %25 = vector.load %arg6[%c0_10, %c0_11, %c0_12] : memref<2x32x128xf32, #tpu.memory_space<vmem>>, vector<2x32x128xf32>
    tpu.vector_store %arg6[%c0_10, %c0_11, %c0_12], %24 {strides = array<i32>} : memref<2x32x128xf32, #tpu.memory_space<vmem>>, vector<2x32x128xf32>,
    %c0_i32_13 = arith.constant 0 : i32
    %26 = arith.cmpi eq, %arg1, %c0_i32_13 : i32
    %27 = arith.extui %26 : i1 to i32
    %c0_i32_14 = arith.constant 0 : i32
    %28 = arith.cmpi ne, %27, %c0_i32_14 : i32
    scf.if %28 {
      %c0_15 = arith.constant 0 : index
      %c0_16 = arith.constant 0 : index
      %c0_17 = arith.constant 0 : index
      %29 = vector.load %arg6[%c0_15, %c0_16, %c0_17] : memref<2x32x128xf32, #tpu.memory_space<vmem>>, vector<2x32x128xf32>
      %cst_18 = arith.constant dense<0.000000e+00> : vector<2x32xf32>
      %30 = vector.multi_reduction <add>, %29, %cst_18 [2] : vector<2x32x128xf32> to vector<2x32xf32>
      %c0_19 = arith.constant 0 : index
      %c0_20 = arith.constant 0 : index
      %31 = vector.load %arg3[%c0_19, %c0_20] : memref<32x128xf32, #tpu.memory_space<vmem>>, vector<32x128xf32>
      %cst_21 = arith.constant dense<0.000000e+00> : vector<2x128xf32>
      %32 = tpu.matmul %30, %31, %cst_21 {dimension_numbers = #tpu.dot_dimension_numbers<[1], [0], [0], [1], [0, 0, 1, 1], [], []>} : vector<2x32xf32>, vector<32x128xf32>, vector<2x128xf32> -> vector<2x128xf32>
      %c0_22 = arith.constant 0 : index
      %c0_23 = arith.constant 0 : index
      %33 = vector.load %arg4[%c0_22, %c0_23] : memref<1x128xf32, #tpu.memory_space<vmem>>, vector<1x128xf32>
      %34 = vector.broadcast %33 : vector<1x128xf32> to vector<2x128xf32>
      %35 = arith.addf %32, %34 : vector<2x128xf32>
      %c0_24 = arith.constant 0 : index
      %c0_25 = arith.constant 0 : index
      %36 = vector.load %arg5[%c0_24, %c0_25] : memref<2x128xf32, #tpu.memory_space<vmem>>, vector<2x128xf32>
      tpu.vector_store %arg5[%c0_24, %c0_25], %35 {strides = array<i32>} : memref<2x128xf32, #tpu.memory_space<vmem>>, vector<2x128xf32>,
    } else {
    }
    return
  }
  func.func @transform_0(%arg0: i32, %arg1: i32) -> (i32, i32, i32) {
    %c0_i32 = arith.constant 0 : i32
    %c0_i32_0 = arith.constant 0 : i32
    return %arg0, %c0_i32, %arg1 : i32, i32, i32
  }
  func.func @transform_1(%arg0: i32, %arg1: i32) -> (i32, i32) {
    %c0_i32 = arith.constant 0 : i32
    %c0_i32_0 = arith.constant 0 : i32
    %c0_i32_1 = arith.constant 0 : i32
    return %c0_i32, %c0_i32_0 : i32, i32
  }
  func.func @transform_2(%arg0: i32, %arg1: i32) -> (i32, i32) {
    %c0_i32 = arith.constant 0 : i32
    %c0_i32_0 = arith.constant 0 : i32
    %c0_i32_1 = arith.constant 0 : i32
    return %c0_i32, %c0_i32_0 : i32, i32
  }
  func.func @transform_3(%arg0: i32, %arg1: i32) -> (i32, i32) {
    %c0_i32 = arith.constant 0 : i32
    %c0_i32_0 = arith.constant 0 : i32
    return %arg0, %c0_i32 : i32, i32
  }
}

module attributes {stable_mosaic.version = 11 : i64} {
  func.func @cls_head_kernel(%arg0: i32, %arg1: i32, %arg2: memref<2x32x256xf32, #tpu.memory_space<vmem>>, %arg3: memref<32x128xf32, #tpu.memory_space<vmem>>, %arg4: memref<1x128xf32, #tpu.memory_space<vmem>>, %arg5: memref<2x128xf32, #tpu.memory_space<vmem>>, %arg6: memref<2x32x128xf32, #tpu.memory_space<vmem>>) attributes {dimension_semantics = [#tpu.dimension_semantics<parallel>, #tpu.dimension_semantics<arbitrary>], iteration_bounds = array<i64: 1, 1>, scalar_prefetch = 0 : i64, scratch_operands = 1 : i64, tpu.core_type = #tpu.core_type<tc>, window_params = [{transform_indices = @transform_0, window_bounds = array<i64: 2, 32, 256>}, {pipeline_mode = #tpu.pipeline_mode<synchronous>, transform_indices = @transform_1, window_bounds = array<i64: 32, 128>}, {pipeline_mode = #tpu.pipeline_mode<synchronous>, transform_indices = @transform_2, window_bounds = array<i64: 1, 128>}, {transform_indices = @transform_3, window_bounds = array<i64: 2, 128>}]} {
    %c0_i32 = arith.constant 0 : i32
    %0 = arith.cmpi eq, %arg1, %c0_i32 : i32
    %1 = arith.extui %0 : i1 to i32
    %c0_i32_0 = arith.constant 0 : i32
    %2 = arith.cmpi ne, %1, %c0_i32_0 : i32
    scf.if %2 {
      %cst_15 = arith.constant 0.000000e+00 : f32
      %29 = vector.broadcast %cst_15 : f32 to vector<2x32x128xf32>
      %c0_16 = arith.constant 0 : index
      %c0_17 = arith.constant 0 : index
      %c0_18 = arith.constant 0 : index
      %30 = vector.load %arg6[%c0_16, %c0_17, %c0_18] : memref<2x32x128xf32, #tpu.memory_space<vmem>>, vector<2x32x128xf32>
      tpu.vector_store %arg6[%c0_16, %c0_17, %c0_18], %29 {strides = array<i32>} : memref<2x32x128xf32, #tpu.memory_space<vmem>>, vector<2x32x128xf32>,
    } else {
    }
    %c0 = arith.constant 0 : index
    %c0_1 = arith.constant 0 : index
    %c0_2 = arith.constant 0 : index
    %3 = vector.load %arg2[%c0, %c0_1, %c0_2] : memref<2x32x256xf32, #tpu.memory_space<vmem>>, vector<2x32x256xf32>
    %cst = arith.constant dense<0.000000e+00> : vector<2x256xf32>
    %4 = vector.multi_reduction <add>, %3, %cst [1] : vector<2x32x256xf32> to vector<2x256xf32>
    %5 = vector.shape_cast %4 : vector<2x256xf32> to vector<2x1x256xf32>
    %cst_3 = arith.constant 3.125000e-02 : f32
    %6 = vector.broadcast %cst_3 : f32 to vector<2x1x256xf32>
    %7 = arith.mulf %5, %6 : vector<2x1x256xf32>
    %8 = vector.broadcast %7 : vector<2x1x256xf32> to vector<2x32x256xf32>
    %9 = arith.subf %3, %8 : vector<2x32x256xf32>
    %10 = arith.mulf %9, %9 : vector<2x32x256xf32>
    %cst_4 = arith.constant dense<0.000000e+00> : vector<2x256xf32>
    %11 = vector.multi_reduction <add>, %10, %cst_4 [1] : vector<2x32x256xf32> to vector<2x256xf32>
    %12 = vector.shape_cast %11 : vector<2x256xf32> to vector<2x1x256xf32>
    %cst_5 = arith.constant 3.125000e-02 : f32
    %13 = vector.broadcast %cst_5 : f32 to vector<2x1x256xf32>
    %14 = arith.mulf %12, %13 : vector<2x1x256xf32>
    %cst_6 = arith.constant 9.99999974E-6 : f32
    %15 = vector.broadcast %cst_6 : f32 to vector<2x1x256xf32>
    %16 = arith.addf %14, %15 : vector<2x1x256xf32>
    %17 = math.rsqrt %16 : vector<2x1x256xf32>
    %18 = vector.broadcast %17 : vector<2x1x256xf32> to vector<2x32x256xf32>
    %19 = arith.mulf %9, %18 : vector<2x32x256xf32>
    %c0_7 = arith.constant 0 : index
    %c0_8 = arith.constant 0 : index
    %c0_9 = arith.constant 0 : index
    %20 = vector.load %arg6[%c0_7, %c0_8, %c0_9] : memref<2x32x128xf32, #tpu.memory_space<vmem>>, vector<2x32x128xf32>
    %21 = vector.extract_strided_slice %19 {offsets = [0, 0, 0], sizes = [2, 32, 128], strides = [1, 1, 1]} : vector<2x32x256xf32> to vector<2x32x128xf32>
    %22 = arith.addf %20, %21 : vector<2x32x128xf32>
    %23 = vector.extract_strided_slice %19 {offsets = [0, 0, 128], sizes = [2, 32, 128], strides = [1, 1, 1]} : vector<2x32x256xf32> to vector<2x32x128xf32>
    %24 = arith.addf %22, %23 : vector<2x32x128xf32>
    %c0_10 = arith.constant 0 : index
    %c0_11 = arith.constant 0 : index
    %c0_12 = arith.constant 0 : index
    %25 = vector.load %arg6[%c0_10, %c0_11, %c0_12] : memref<2x32x128xf32, #tpu.memory_space<vmem>>, vector<2x32x128xf32>
    tpu.vector_store %arg6[%c0_10, %c0_11, %c0_12], %24 {strides = array<i32>} : memref<2x32x128xf32, #tpu.memory_space<vmem>>, vector<2x32x128xf32>,
    %c0_i32_13 = arith.constant 0 : i32
    %26 = arith.cmpi eq, %arg1, %c0_i32_13 : i32
    %27 = arith.extui %26 : i1 to i32
    %c0_i32_14 = arith.constant 0 : i32
    %28 = arith.cmpi ne, %27, %c0_i32_14 : i32
    scf.if %28 {
      %c0_15 = arith.constant 0 : index
      %c0_16 = arith.constant 0 : index
      %c0_17 = arith.constant 0 : index
      %29 = vector.load %arg6[%c0_15, %c0_16, %c0_17] : memref<2x32x128xf32, #tpu.memory_space<vmem>>, vector<2x32x128xf32>
      %cst_18 = arith.constant dense<0.000000e+00> : vector<2x32xf32>
      %30 = vector.multi_reduction <add>, %29, %cst_18 [2] : vector<2x32x128xf32> to vector<2x32xf32>
      %c0_19 = arith.constant 0 : index
      %c0_20 = arith.constant 0 : index
      %31 = vector.load %arg3[%c0_19, %c0_20] : memref<32x128xf32, #tpu.memory_space<vmem>>, vector<32x128xf32>
      %cst_21 = arith.constant dense<0.000000e+00> : vector<2x128xf32>
      %32 = tpu.matmul %30, %31, %cst_21 {dimension_numbers = #tpu.dot_dimension_numbers<[1], [0], [0], [1], [0, 0, 1, 1], [], []>} : vector<2x32xf32>, vector<32x128xf32>, vector<2x128xf32> -> vector<2x128xf32>
      %c0_22 = arith.constant 0 : index
      %c0_23 = arith.constant 0 : index
      %33 = vector.load %arg4[%c0_22, %c0_23] : memref<1x128xf32, #tpu.memory_space<vmem>>, vector<1x128xf32>
      %34 = vector.broadcast %33 : vector<1x128xf32> to vector<2x128xf32>
      %35 = arith.addf %32, %34 : vector<2x128xf32>
      %c0_24 = arith.constant 0 : index
      %c0_25 = arith.constant 0 : index
      %36 = vector.load %arg5[%c0_24, %c0_25] : memref<2x128xf32, #tpu.memory_space<vmem>>, vector<2x128xf32>
      tpu.vector_store %arg5[%c0_24, %c0_25], %35 {strides = array<i32>} : memref<2x128xf32, #tpu.memory_space<vmem>>, vector<2x128xf32>,
    } else {
    }
    return
  }
  func.func @transform_0(%arg0: i32, %arg1: i32) -> (i32, i32, i32) {
    %c0_i32 = arith.constant 0 : i32
    %c0_i32_0 = arith.constant 0 : i32
    return %arg0, %c0_i32, %arg1 : i32, i32, i32
  }
  func.func @transform_1(%arg0: i32, %arg1: i32) -> (i32, i32) {
    %c0_i32 = arith.constant 0 : i32
    %c0_i32_0 = arith.constant 0 : i32
    %c0_i32_1 = arith.constant 0 : i32
    return %c0_i32, %c0_i32_0 : i32, i32
  }
  func.func @transform_2(%arg0: i32, %arg1: i32) -> (i32, i32) {
    %c0_i32 = arith.constant 0 : i32
    %c0_i32_0 = arith.constant 0 : i32
    %c0_i32_1 = arith.constant 0 : i32
    return %c0_i32, %c0_i32_0 : i32, i32
  }
  func.func @transform_3(%arg0: i32, %arg1: i32) -> (i32, i32) {
    %c0_i32 = arith.constant 0 : i32
    %c0_i32_0 = arith.constant 0 : i32
    return %arg0, %c0_i32 : i32, i32
  }
}

</mosaic_0001>

<llo_original>
// kernel: tpu_custom_call.1
$region0: #{tpu_custom_call.1}
  #allocation0 [shape = 'u32[]', space=smem, size = 0x4, offset = 0x4, fixed_abs, tag = 'smem constant byte address 0x4 - core index']
  #allocation1 [shape = 'u32[72,128]{1,0:T(1,128)}', space=vmem, size = 0x9000, scoped, tag = 'internal scratch']
  #allocation2 [shape = 'f32[2,32,128]{2,1,0:T(8,128)}', space=vmem, size = 0x8000, scoped, tag = 'scratch operand']
  %s0 = inlined_call_operand.hbm [shape: f32[2,32,256], index: 0, kind: input, shape index: {}]
  %s1 = inlined_call_operand.hbm [shape: f32[32,128], index: 1, kind: input, shape index: {}]
  %s2 = inlined_call_operand.vmem [shape: f32[1,128], index: 2, kind: input, shape index: {}]
  %s3 = inlined_call_operand.hbm [shape: f32[2,128], index: 3, kind: output, shape index: {}]
  %s4 = sld [smem:[#allocation0]]
  $region38: #{tpu_custom_call.1} parent=0
    _
  %s6 = ssub.s32 1, %s4
  %s7 = scalar_select 0, %s6, %s4
  $region1: #{tpu_custom_call.1} parent=0
    #allocation3 [shape = 'u8[65536]{0}', space=vmem, size = 0x10000, scoped, tag = 'input window, operand 0, single buffered']
    #allocation4 [shape = 's32[1]{0}', space=sflag, size = 0x4, scoped, tag = 'scoped memory for tpu_custom_call.1']
    #allocation5 [shape = 's32[1]{0}', space=sflag, size = 0x4, scoped, tag = 'scoped memory for tpu_custom_call.1']
    #allocation6 [shape = 'u8[16384]{0}', space=vmem, size = 0x4000, scoped, tag = 'input window, operand 1, single buffered']
    #allocation7 [shape = 's32[1]{0}', space=sflag, size = 0x4, scoped, tag = 'scoped memory for tpu_custom_call.1']
    #allocation8 [shape = 'u8[1024]{0}', space=vmem, size = 0x400, scoped, tag = 'output window, operand 0, single buffered']
    %8 = vsyncpa [#allocation4], 0
    %9 = vsyncpa [#allocation7], 0
    %10 = vsyncpa [#allocation5], 0
    // Predicated region
    $region2: #{tpu_custom_call.1} parent=1 // pred_check
      _
    $region3: #{tpu_custom_call.1} parent=1 // pred_check_branch
      %12 = sbr.rel (0) target = $region5
    $region4: #{tpu_custom_call.1} parent=1 // pred_region
      %14 = vsyncadd [#allocation4], 0
      %s15 = sshll.u32 %s0, 4
      %s16 = int_to_ptr.hbm [resolvable:$true] %s15
      %s17 = sshll.u32 [#allocation3], 4
      %s18 = int_to_ptr.vmem [resolvable:$true] %s17
      %23 = dma.hbm_to_vmem [thread:$0]  %s16, 2048, %s18, [#allocation4], 256, 256, 16
    $region5: #{tpu_custom_call.1} parent=1 // pred_fallthru
      _
    // Predicated region
    $region6: #{tpu_custom_call.1} parent=1 // pred_check
      _
    $region7: #{tpu_custom_call.1} parent=1 // pred_check_branch
      %25 = sbr.rel (0) target = $region9
    $region8: #{tpu_custom_call.1} parent=1 // pred_region
      %27 = vsyncadd [#allocation7], 0
      %s28 = sshll.u32 %s1, 4
      %s29 = int_to_ptr.hbm [resolvable:$true] %s28
      %s30 = sshll.u32 [#allocation6], 4
      %s31 = int_to_ptr.vmem [resolvable:$true] %s30
      %36 = dma.hbm_to_vmem [thread:$0]  %s29, 512, %s31, [#allocation7], 128, 128, 8
    $region9: #{tpu_custom_call.1} parent=1 // pred_fallthru
      _
    // Predicated region
    $region10: #{tpu_custom_call.1} parent=1 // pred_check
      _
    $region11: #{tpu_custom_call.1} parent=1 // pred_check_branch
      %38 = sbr.rel (0) target = $region13
    $region12: #{tpu_custom_call.1} parent=1 // pred_region
      _
    $region13: #{tpu_custom_call.1} parent=1 // pred_fallthru
      _
    // Predicated region
    $region14: #{tpu_custom_call.1} parent=1 // pred_check
      _
    $region15: #{tpu_custom_call.1} parent=1 // pred_check_branch
      %40 = sbr.rel (0) target = $region17
    $region16: #{tpu_custom_call.1} parent=1 // pred_region
      %42 = dma.done [#allocation4], 2048
    $region17: #{tpu_custom_call.1} parent=1 // pred_fallthru
      _
    // Predicated region
    $region18: #{tpu_custom_call.1} parent=1 // pred_check
      _
    $region19: #{tpu_custom_call.1} parent=1 // pred_check_branch
      %44 = sbr.rel (0) target = $region21
    $region20: #{tpu_custom_call.1} parent=1 // pred_region
      %46 = dma.done [#allocation7], 512
    $region21: #{tpu_custom_call.1} parent=1 // pred_fallthru
      _
    %p47 = scmp.eq.s32.totalorder 0, 0
    // Predicated region
    $region22: #{tpu_custom_call.1} parent=1 // pred_check
      %p48 = pneg %p47
    $region23: #{tpu_custom_call.1} parent=1 // pred_check_branch
      %50 = sbr.rel (%p48) target = $region25
    $region24: #{tpu_custom_call.1} parent=1 // pred_region
      %51 = vst [vmem:[#allocation2] sm:$0xff] 0.0
      %52 = vst [vmem:[#allocation2 + $0x8] sm:$0xff] 0.0
      %53 = vst [vmem:[#allocation2 + $0x10] sm:$0xff] 0.0
      %54 = vst [vmem:[#allocation2 + $0x18] sm:$0xff] 0.0
      %55 = vst [vmem:[#allocation2 + $0x20] sm:$0xff] 0.0
      %56 = vst [vmem:[#allocation2 + $0x28] sm:$0xff] 0.0
      %57 = vst [vmem:[#allocation2 + $0x30] sm:$0xff] 0.0
      %58 = vst [vmem:[#allocation2 + $0x38] sm:$0xff] 0.0
    $region25: #{tpu_custom_call.1} parent=1 // pred_fallthru
      _
    %v59 = vld [vmem:[#allocation3] sm:$0xff]
    %v60 = vld [vmem:[#allocation3 + $0x8] sm:$0xff]
    %v61 = vld [vmem:[#allocation3 + $0x10] sm:$0xff]
    %v62 = vld [vmem:[#allocation3 + $0x18] sm:$0xff]
    %v63 = vld [vmem:[#allocation3 + $0x20] sm:$0xff]
    %v64 = vld [vmem:[#allocation3 + $0x28] sm:$0xff]
    %v65 = vld [vmem:[#allocation3 + $0x30] sm:$0xff]
    %v66 = vld [vmem:[#allocation3 + $0x38] sm:$0xff]
    %v67 = vld [vmem:[#allocation3 + $0x40] sm:$0xff]
    %v68 = vld [vmem:[#allocation3 + $0x48] sm:$0xff]
    %v69 = vld [vmem:[#allocation3 + $0x50] sm:$0xff]
    %v70 = vld [vmem:[#allocation3 + $0x58] sm:$0xff]
    %v71 = vld [vmem:[#allocation3 + $0x60] sm:$0xff]
    %v72 = vld [vmem:[#allocation3 + $0x68] sm:$0xff]
    %v73 = vld [vmem:[#allocation3 + $0x70] sm:$0xff]
    %v74 = vld [vmem:[#allocation3 + $0x78] sm:$0xff]
    %v75 = vadd.f32 %v59, %v61
    %v76 = vadd.f32 %v75, %v63
    %v77 = vadd.f32 %v76, %v65
    %v78 = vrot.slane %v77, 4
    %v79 = vadd.f32 %v77, %v78
    %v80 = vrot.slane %v79, 2
    %v81 = vadd.f32 %v79, %v80
    %v82 = vrot.slane %v81, 1
    %v83 = vadd.f32 %v81, %v82
    %v84 = vadd.f32 %v60, %v62
    %v85 = vadd.f32 %v84, %v64
    %v86 = vadd.f32 %v85, %v66
    %v87 = vrot.slane %v86, 4
    %v88 = vadd.f32 %v86, %v87
    %v89 = vrot.slane %v88, 2
    %v90 = vadd.f32 %v88, %v89
    %v91 = vrot.slane %v90, 1
    %v92 = vadd.f32 %v90, %v91
    %v93 = vadd.f32 %v67, %v69
    %v94 = vadd.f32 %v93, %v71
    %v95 = vadd.f32 %v94, %v73
    %v96 = vrot.slane %v95, 4
    %v97 = vadd.f32 %v95, %v96
    %v98 = vrot.slane %v97, 2
    %v99 = vadd.f32 %v97, %v98
    %v100 = vrot.slane %v99, 1
    %v101 = vadd.f32 %v99, %v100
    %v102 = vadd.f32 %v68, %v70
    %v103 = vadd.f32 %v102, %v72
    %v104 = vadd.f32 %v103, %v74
    %v105 = vrot.slane %v104, 4
    %v106 = vadd.f32 %v104, %v105
    %v107 = vrot.slane %v106, 2
    %v108 = vadd.f32 %v106, %v107
    %v109 = vrot.slane %v108, 1
    %v110 = vadd.f32 %v108, %v109
    %v111 = vmul.f32 %v83, 0.03125
    %v112 = vmul.f32 %v92, 0.03125
    %v113 = vmul.f32 %v101, 0.03125
    %v114 = vmul.f32 %v110, 0.03125
    %v115 = vsub.f32 %v59, %v111
    %v116 = vsub.f32 %v60, %v112
    %v117 = vsub.f32 %v61, %v111
    %v118 = vsub.f32 %v62, %v112
    %v119 = vsub.f32 %v63, %v111
    %v120 = vsub.f32 %v64, %v112
    %v121 = vsub.f32 %v65, %v111
    %v122 = vsub.f32 %v66, %v112
    %v123 = vsub.f32 %v67, %v113
    %v124 = vsub.f32 %v68, %v114
    %v125 = vsub.f32 %v69, %v113
    %v126 = vsub.f32 %v70, %v114
    %v127 = vsub.f32 %v71, %v113
    %v128 = vsub.f32 %v72, %v114
    %v129 = vsub.f32 %v73, %v113
    %v130 = vsub.f32 %v74, %v114
    %v131 = vmul.f32 %v115, %v115
    %v132 = vmul.f32 %v116, %v116
    %v133 = vmul.f32 %v117, %v117
    %v134 = vmul.f32 %v118, %v118
    %v135 = vmul.f32 %v119, %v119
    %v136 = vmul.f32 %v120, %v120
    %v137 = vmul.f32 %v121, %v121
    %v138 = vmul.f32 %v122, %v122
    %v139 = vmul.f32 %v123, %v123
    %v140 = vmul.f32 %v124, %v124
    %v141 = vmul.f32 %v125, %v125
    %v142 = vmul.f32 %v126, %v126
    %v143 = vmul.f32 %v127, %v127
    %v144 = vmul.f32 %v128, %v128
    %v145 = vmul.f32 %v129, %v129
    %v146 = vmul.f32 %v130, %v130
    %v147 = vadd.f32 %v131, %v133
    %v148 = vadd.f32 %v147, %v135
    %v149 = vadd.f32 %v148, %v137
    %v150 = vrot.slane %v149, 4
    %v151 = vadd.f32 %v149, %v150
    %v152 = vrot.slane %v151, 2
    %v153 = vadd.f32 %v151, %v152
    %v154 = vrot.slane %v153, 1
    %v155 = vadd.f32 %v153, %v154
    %v156 = vadd.f32 %v132, %v134
    %v157 = vadd.f32 %v156, %v136
    %v158 = vadd.f32 %v157, %v138
    %v159 = vrot.slane %v158, 4
    %v160 = vadd.f32 %v158, %v159
    %v161 = vrot.slane %v160, 2
    %v162 = vadd.f32 %v160, %v161
    %v163 = vrot.slane %v162, 1
    %v164 = vadd.f32 %v162, %v163
    %v165 = vadd.f32 %v139, %v141
    %v166 = vadd.f32 %v165, %v143
    %v167 = vadd.f32 %v166, %v145
    %v168 = vrot.slane %v167, 4
    %v169 = vadd.f32 %v167, %v168
    %v170 = vrot.slane %v169, 2
    %v171 = vadd.f32 %v169, %v170
    %v172 = vrot.slane %v171, 1
    %v173 = vadd.f32 %v171, %v172
    %v174 = vadd.f32 %v140, %v142
    %v175 = vadd.f32 %v174, %v144
    %v176 = vadd.f32 %v175, %v146
    %v177 = vrot.slane %v176, 4
    %v178 = vadd.f32 %v176, %v177
    %v179 = vrot.slane %v178, 2
    %v180 = vadd.f32 %v178, %v179
    %v181 = vrot.slane %v180, 1
    %v182 = vadd.f32 %v180, %v181
    %v183 = vmul.f32 %v155, 0.03125
    %v184 = vmul.f32 %v164, 0.03125
    %v185 = vmul.f32 %v173, 0.03125
    %v186 = vmul.f32 %v182, 0.03125
    %v187 = vadd.f32 %v183, 1e-05
    %v188 = vadd.f32 %v184, 1e-05
    %v189 = vadd.f32 %v185, 1e-05
    %v190 = vadd.f32 %v186, 1e-05
    %v191 = vrsqrt.pop %v187
    %v192 = vmul.f32 %v191, %v187
    %v193 = vmul.f32 %v192, %v191
    %v194 = vmul.f32 0.5, %v193
    %v195 = vsub.f32 1.5, %v194
    %v196 = vmul.f32 %v191, %v195
    %vm197 = vweird.f32 %v187
    %vm198 = vweird.f32 %v191
    %vm199 = vmor %vm197, %vm198
    %v200 = vsel %vm199, %v191, %v196
    %v201 = vrsqrt.pop %v188
    %v202 = vmul.f32 %v201, %v188
    %v203 = vmul.f32 %v202, %v201
    %v204 = vmul.f32 0.5, %v203
    %v205 = vsub.f32 1.5, %v204
    %v206 = vmul.f32 %v201, %v205
    %vm207 = vweird.f32 %v188
    %vm208 = vweird.f32 %v201
    %vm209 = vmor %vm207, %vm208
    %v210 = vsel %vm209, %v201, %v206
    %v211 = vrsqrt.pop %v189
    %v212 = vmul.f32 %v211, %v189
    %v213 = vmul.f32 %v212, %v211
    %v214 = vmul.f32 0.5, %v213
    %v215 = vsub.f32 1.5, %v214
    %v216 = vmul.f32 %v211, %v215
    %vm217 = vweird.f32 %v189
    %vm218 = vweird.f32 %v211
    %vm219 = vmor %vm217, %vm218
    %v220 = vsel %vm219, %v211, %v216
    %v221 = vrsqrt.pop %v190
    %v222 = vmul.f32 %v221, %v190
    %v223 = vmul.f32 %v222, %v221
    %v224 = vmul.f32 0.5, %v223
    %v225 = vsub.f32 1.5, %v224
    %v226 = vmul.f32 %v221, %v225
    %vm227 = vweird.f32 %v190
    %vm228 = vweird.f32 %v221
    %vm229 = vmor %vm227, %vm228
    %v230 = vsel %vm229, %v221, %v226
    %v231 = vmul.f32 %v115, %v200
    %v232 = vmul.f32 %v116, %v210
    %v233 = vmul.f32 %v117, %v200
    %v234 = vmul.f32 %v118, %v210
    %v235 = vmul.f32 %v119, %v200
    %v236 = vmul.f32 %v120, %v210
    %v237 = vmul.f32 %v121, %v200
    %v238 = vmul.f32 %v122, %v210
    %v239 = vmul.f32 %v123, %v220
    %v240 = vmul.f32 %v124, %v230
    %v241 = vmul.f32 %v125, %v220
    %v242 = vmul.f32 %v126, %v230
    %v243 = vmul.f32 %v127, %v220
    %v244 = vmul.f32 %v128, %v230
    %v245 = vmul.f32 %v129, %v220
    %v246 = vmul.f32 %v130, %v230
    %v247 = vld [vmem:[#allocation2] sm:$0xff]
    %v248 = vld [vmem:[#allocation2 + $0x8] sm:$0xff]
    %v249 = vld [vmem:[#allocation2 + $0x10] sm:$0xff]
    %v250 = vld [vmem:[#allocation2 + $0x18] sm:$0xff]
    %v251 = vld [vmem:[#allocation2 + $0x20] sm:$0xff]
    %v252 = vld [vmem:[#allocation2 + $0x28] sm:$0xff]
    %v253 = vld [vmem:[#allocation2 + $0x30] sm:$0xff]
    %v254 = vld [vmem:[#allocation2 + $0x38] sm:$0xff]
    %v255 = vadd.f32 %v247, %v231
    %v256 = vadd.f32 %v248, %v233
    %v257 = vadd.f32 %v249, %v235
    %v258 = vadd.f32 %v250, %v237
    %v259 = vadd.f32 %v251, %v239
    %v260 = vadd.f32 %v252, %v241
    %v261 = vadd.f32 %v253, %v243
    %v262 = vadd.f32 %v254, %v245
    %v263 = vadd.f32 %v255, %v232
    %v264 = vadd.f32 %v256, %v234
    %v265 = vadd.f32 %v257, %v236
    %v266 = vadd.f32 %v258, %v238
    %v267 = vadd.f32 %v259, %v240
    %v268 = vadd.f32 %v260, %v242
    %v269 = vadd.f32 %v261, %v244
    %v270 = vadd.f32 %v262, %v246
    %271 = vst [vmem:[#allocation2] sm:$0xff] %v263
    %272 = vst [vmem:[#allocation2 + $0x8] sm:$0xff] %v264
    %273 = vst [vmem:[#allocation2 + $0x10] sm:$0xff] %v265
    %274 = vst [vmem:[#allocation2 + $0x18] sm:$0xff] %v266
    %275 = vst [vmem:[#allocation2 + $0x20] sm:$0xff] %v267
    %276 = vst [vmem:[#allocation2 + $0x28] sm:$0xff] %v268
    %277 = vst [vmem:[#allocation2 + $0x30] sm:$0xff] %v269
    %278 = vst [vmem:[#allocation2 + $0x38] sm:$0xff] %v270
    // Predicated region
    $region26: #{tpu_custom_call.1} parent=1 // pred_check
      %p279 = pneg %p47
    $region27: #{tpu_custom_call.1} parent=1 // pred_check_branch
      %281 = sbr.rel (%p279) target = $region29
    $region28: #{tpu_custom_call.1} parent=1 // pred_region
      %v282 = vld [vmem:[#allocation2] sm:$0xff]
      %v283 = vld [vmem:[#allocation2 + $0x8] sm:$0xff]
      %v284 = vld [vmem:[#allocation2 + $0x10] sm:$0xff]
      %v285 = vld [vmem:[#allocation2 + $0x18] sm:$0xff]
      %v286 = vld [vmem:[#allocation2 + $0x20] sm:$0xff]
      %v287 = vld [vmem:[#allocation2 + $0x28] sm:$0xff]
      %v288 = vld [vmem:[#allocation2 + $0x30] sm:$0xff]
      %v289 = vld [vmem:[#allocation2 + $0x38] sm:$0xff]
      %290 = vadd.xlane.f32.xlu0 %v282
      %v291 = vpop.xlane.xlu0 %290
      %292 = vadd.xlane.f32.xlu0 %v283
      %v293 = vpop.xlane.xlu0 %292
      %294 = vadd.xlane.f32.xlu0 %v284
      %v295 = vpop.xlane.xlu0 %294
      %296 = vadd.xlane.f32.xlu0 %v285
      %v297 = vpop.xlane.xlu0 %296
      %298 = vadd.xlane.f32.xlu0 %v286
      %v299 = vpop.xlane.xlu0 %298
      %300 = vadd.xlane.f32.xlu0 %v287
      %v301 = vpop.xlane.xlu0 %300
      %302 = vadd.xlane.f32.xlu0 %v288
      %v303 = vpop.xlane.xlu0 %302
      %304 = vadd.xlane.f32.xlu0 %v289
      %v305 = vpop.xlane.xlu0 %304
      %v306 = vld [vmem:[#allocation6] sm:$0xff]
      %v307 = vld [vmem:[#allocation6 + $0x8] sm:$0xff]
      %v308 = vld [vmem:[#allocation6 + $0x10] sm:$0xff]
      %v309 = vld [vmem:[#allocation6 + $0x18] sm:$0xff]
      %v310 = vld [vmem:[%s2] sm:$0x1]
      %v312 = vperm.slane %v310, 0
      %v322 = vlaneseq
      %v323 = vand.u32 %v322, 127
      %v324 = vperm.slane %v291, %v323
      %v325 = vadd.s32 %v323, 4294967288
      %v326 = vperm.slane %v293, %v325
      %vm327 = vcmask 130112
      %v328 = vsel %vm327, %v326, %v324
      %v329 = vadd.s32 %v323, 4294967280
      %v330 = vperm.slane %v295, %v329
      %vm331 = vcmask 195712
      %v332 = vsel %vm331, %v330, %v328
      %v333 = vadd.s32 %v323, 4294967272
      %v334 = vperm.slane %v297, %v333
      %vm335 = vcmask 261312
      %v336 = vsel %vm335, %v334, %v332
      %v337 = vperm.slane %v299, %v323
      %v338 = vperm.slane %v301, %v325
      %v339 = vsel %vm327, %v338, %v337
      %v340 = vperm.slane %v303, %v329
      %v341 = vsel %vm331, %v340, %v339
      %v342 = vperm.slane %v305, %v333
      %v343 = vsel %vm335, %v342, %v341
      %vm344 = vcmask 1041409
      %v345 = vsel %vm344, %v343, %v336
      %vm346 = vcmask 261120
      %v347 = vsel %vm346, %v345, 0
      %349 = vmatpush.msra.mxu0 0.0
      %350 = vmatpush.msra.mxu0 0.0
      %351 = vmatpush.msra.mxu0 0.0
      %352 = vmatpush.msra.mxu0 0.0
      %353 = vmatpush.msra.mxu0 0.0
      %354 = vmatpush.msra.mxu0 0.0
      %355 = vmatpush.msra.mxu0 0.0
      %356 = vmatpush.msra.mxu0 0.0
      %357 = vmatpush.msra.mxu0 0.0
      %358 = vmatpush.msra.mxu0 0.0
      %359 = vmatpush.msra.mxu0 0.0
      %360 = vmatpush.msra.mxu0 0.0
      %361 = vmatpush.msra.mxu0 %v309
      %362 = vmatpush.msra.mxu0 %v308
      %363 = vmatpush.msra.mxu0 %v307
      %364 = vmatpush.msra.mxu0 %v306
      %365 = vmatmul.f32.gmra.mxu0 %v347
      %v366 = vpop.f32.mrf.mxu0
      %v367 = vadd.f32 %v312, %v366
      %368 = vdwg.mxu0
      %369 = vst [vmem:[#allocation8] sm:$0x3] %v367
    $region29: #{tpu_custom_call.1} parent=1 // pred_fallthru
      _
    // Predicated region
    $region30: #{tpu_custom_call.1} parent=1 // pred_check
      _
    $region31: #{tpu_custom_call.1} parent=1 // pred_check_branch
      %371 = sbr.rel (0) target = $region33
    $region32: #{tpu_custom_call.1} parent=1 // pred_region
      %373 = vsyncadd [#allocation5], 0
      %s375 = sshll.u32 [#allocation8], 4
      %s376 = int_to_ptr.vmem [resolvable:$true] %s375
      %s377 = sshll.u32 %s3, 4
      %s378 = int_to_ptr.hbm [resolvable:$true] %s377
      %380 = dma.vmem_to_hbm [thread:$0]  %s376, 32, %s378, [#allocation5]
    $region33: #{tpu_custom_call.1} parent=1 // pred_fallthru
      _
    // Predicated region
    $region34: #{tpu_custom_call.1} parent=1 // pred_check
      _
    $region35: #{tpu_custom_call.1} parent=1 // pred_check_branch
      %382 = sbr.rel (0) target = $region37
    $region36: #{tpu_custom_call.1} parent=1 // pred_region
      %384 = dma.done [#allocation5], 32
    $region37: #{tpu_custom_call.1} parent=1 // pred_fallthru
      _
    %385 = vsyncpa [#allocation4], 1
    %386 = vsyncpa [#allocation7], 1
    %387 = vsyncpa [#allocation5], 1

// kernel: tpu_custom_call.1
$region0: #{tpu_custom_call.1}
  #allocation0 [shape = 'u32[]', space=smem, size = 0x4, offset = 0x4, fixed_abs, tag = 'smem constant byte address 0x4 - core index']
  #allocation1 [shape = 'u32[72,128]{1,0:T(1,128)}', space=vmem, size = 0x9000, scoped, tag = 'internal scratch']
  #allocation2 [shape = 'f32[2,32,128]{2,1,0:T(8,128)}', space=vmem, size = 0x8000, scoped, tag = 'scratch operand']
  %s0 = inlined_call_operand.hbm [shape: f32[2,32,256], index: 0, kind: input, shape index: {}]
  %s1 = inlined_call_operand.hbm [shape: f32[32,128], index: 1, kind: input, shape index: {}]
  %s2 = inlined_call_operand.vmem [shape: f32[1,128], index: 2, kind: input, shape index: {}]
  %s3 = inlined_call_operand.hbm [shape: f32[2,128], index: 3, kind: output, shape index: {}]
  %s4 = sld [smem:[#allocation0]]
  $region38: #{tpu_custom_call.1} parent=0
    _
  %s6 = ssub.s32 1, %s4
  %s7 = scalar_select 0, %s6, %s4
  $region1: #{tpu_custom_call.1} parent=0
    #allocation3 [shape = 'u8[65536]{0}', space=vmem, size = 0x10000, scoped, tag = 'input window, operand 0, single buffered']
    #allocation4 [shape = 's32[1]{0}', space=sflag, size = 0x4, scoped, tag = 'scoped memory for tpu_custom_call.1']
    #allocation5 [shape = 's32[1]{0}', space=sflag, size = 0x4, scoped, tag = 'scoped memory for tpu_custom_call.1']
    #allocation6 [shape = 'u8[16384]{0}', space=vmem, size = 0x4000, scoped, tag = 'input window, operand 1, single buffered']
    #allocation7 [shape = 's32[1]{0}', space=sflag, size = 0x4, scoped, tag = 'scoped memory for tpu_custom_call.1']
    #allocation8 [shape = 'u8[1024]{0}', space=vmem, size = 0x400, scoped, tag = 'output window, operand 0, single buffered']
    %8 = vsyncpa [#allocation4], 0
    %9 = vsyncpa [#allocation7], 0
    %10 = vsyncpa [#allocation5], 0
    // Predicated region
    $region2: #{tpu_custom_call.1} parent=1 // pred_check
      _
    $region3: #{tpu_custom_call.1} parent=1 // pred_check_branch
      %12 = sbr.rel (0) target = $region5
    $region4: #{tpu_custom_call.1} parent=1 // pred_region
      %14 = vsyncadd [#allocation4], 0
      %s15 = sshll.u32 %s0, 4
      %s16 = int_to_ptr.hbm [resolvable:$true] %s15
      %s17 = sshll.u32 [#allocation3], 4
      %s18 = int_to_ptr.vmem [resolvable:$true] %s17
      %23 = dma.hbm_to_vmem [thread:$0]  %s16, 2048, %s18, [#allocation4], 256, 256, 16
    $region5: #{tpu_custom_call.1} parent=1 // pred_fallthru
      _
    // Predicated region
    $region6: #{tpu_custom_call.1} parent=1 // pred_check
      _
    $region7: #{tpu_custom_call.1} parent=1 // pred_check_branch
      %25 = sbr.rel (0) target = $region9
    $region8: #{tpu_custom_call.1} parent=1 // pred_region
      %27 = vsyncadd [#allocation7], 0
      %s28 = sshll.u32 %s1, 4
      %s29 = int_to_ptr.hbm [resolvable:$true] %s28
      %s30 = sshll.u32 [#allocation6], 4
      %s31 = int_to_ptr.vmem [resolvable:$true] %s30
      %36 = dma.hbm_to_vmem [thread:$0]  %s29, 512, %s31, [#allocation7], 128, 128, 8
    $region9: #{tpu_custom_call.1} parent=1 // pred_fallthru
      _
    // Predicated region
    $region10: #{tpu_custom_call.1} parent=1 // pred_check
      _
    $region11: #{tpu_custom_call.1} parent=1 // pred_check_branch
      %38 = sbr.rel (0) target = $region13
    $region12: #{tpu_custom_call.1} parent=1 // pred_region
      _
    $region13: #{tpu_custom_call.1} parent=1 // pred_fallthru
      _
    // Predicated region
    $region14: #{tpu_custom_call.1} parent=1 // pred_check
      _
    $region15: #{tpu_custom_call.1} parent=1 // pred_check_branch
      %40 = sbr.rel (0) target = $region17
    $region16: #{tpu_custom_call.1} parent=1 // pred_region
      %42 = dma.done [#allocation4], 2048
    $region17: #{tpu_custom_call.1} parent=1 // pred_fallthru
      _
    // Predicated region
    $region18: #{tpu_custom_call.1} parent=1 // pred_check
      _
    $region19: #{tpu_custom_call.1} parent=1 // pred_check_branch
      %44 = sbr.rel (0) target = $region21
    $region20: #{tpu_custom_call.1} parent=1 // pred_region
      %46 = dma.done [#allocation7], 512
    $region21: #{tpu_custom_call.1} parent=1 // pred_fallthru
      _
    %p47 = scmp.eq.s32.totalorder 0, 0
    // Predicated region
    $region22: #{tpu_custom_call.1} parent=1 // pred_check
      %p48 = pneg %p47
    $region23: #{tpu_custom_call.1} parent=1 // pred_check_branch
      %50 = sbr.rel (%p48) target = $region25
    $region24: #{tpu_custom_call.1} parent=1 // pred_region
      %51 = vst [vmem:[#allocation2] sm:$0xff] 0.0
      %52 = vst [vmem:[#allocation2 + $0x8] sm:$0xff] 0.0
      %53 = vst [vmem:[#allocation2 + $0x10] sm:$0xff] 0.0
      %54 = vst [vmem:[#allocation2 + $0x18] sm:$0xff] 0.0
      %55 = vst [vmem:[#allocation2 + $0x20] sm:$0xff] 0.0
      %56 = vst [vmem:[#allocation2 + $0x28] sm:$0xff] 0.0
      %57 = vst [vmem:[#allocation2 + $0x30] sm:$0xff] 0.0
      %58 = vst [vmem:[#allocation2 + $0x38] sm:$0xff] 0.0
    $region25: #{tpu_custom_call.1} parent=1 // pred_fallthru
      _
    %v59 = vld [vmem:[#allocation3] sm:$0xff]
    %v60 = vld [vmem:[#allocation3 + $0x8] sm:$0xff]
    %v61 = vld [vmem:[#allocation3 + $0x10] sm:$0xff]
    %v62 = vld [vmem:[#allocation3 + $0x18] sm:$0xff]
    %v63 = vld [vmem:[#allocation3 + $0x20] sm:$0xff]
    %v64 = vld [vmem:[#allocation3 + $0x28] sm:$0xff]
    %v65 = vld [vmem:[#allocation3 + $0x30] sm:$0xff]
    %v66 = vld [vmem:[#allocation3 + $0x38] sm:$0xff]
    %v67 = vld [vmem:[#allocation3 + $0x40] sm:$0xff]
    %v68 = vld [vmem:[#allocation3 + $0x48] sm:$0xff]
    %v69 = vld [vmem:[#allocation3 + $0x50] sm:$0xff]
    %v70 = vld [vmem:[#allocation3 + $0x58] sm:$0xff]
    %v71 = vld [vmem:[#allocation3 + $0x60] sm:$0xff]
    %v72 = vld [vmem:[#allocation3 + $0x68] sm:$0xff]
    %v73 = vld [vmem:[#allocation3 + $0x70] sm:$0xff]
    %v74 = vld [vmem:[#allocation3 + $0x78] sm:$0xff]
    %v75 = vadd.f32 %v59, %v61
    %v76 = vadd.f32 %v75, %v63
    %v77 = vadd.f32 %v76, %v65
    %v78 = vrot.slane %v77, 4
    %v79 = vadd.f32 %v77, %v78
    %v80 = vrot.slane %v79, 2
    %v81 = vadd.f32 %v79, %v80
    %v82 = vrot.slane %v81, 1
    %v83 = vadd.f32 %v81, %v82
    %v84 = vadd.f32 %v60, %v62
    %v85 = vadd.f32 %v84, %v64
    %v86 = vadd.f32 %v85, %v66
    %v87 = vrot.slane %v86, 4
    %v88 = vadd.f32 %v86, %v87
    %v89 = vrot.slane %v88, 2
    %v90 = vadd.f32 %v88, %v89
    %v91 = vrot.slane %v90, 1
    %v92 = vadd.f32 %v90, %v91
    %v93 = vadd.f32 %v67, %v69
    %v94 = vadd.f32 %v93, %v71
    %v95 = vadd.f32 %v94, %v73
    %v96 = vrot.slane %v95, 4
    %v97 = vadd.f32 %v95, %v96
    %v98 = vrot.slane %v97, 2
    %v99 = vadd.f32 %v97, %v98
    %v100 = vrot.slane %v99, 1
    %v101 = vadd.f32 %v99, %v100
    %v102 = vadd.f32 %v68, %v70
    %v103 = vadd.f32 %v102, %v72
    %v104 = vadd.f32 %v103, %v74
    %v105 = vrot.slane %v104, 4
    %v106 = vadd.f32 %v104, %v105
    %v107 = vrot.slane %v106, 2
    %v108 = vadd.f32 %v106, %v107
    %v109 = vrot.slane %v108, 1
    %v110 = vadd.f32 %v108, %v109
    %v111 = vmul.f32 %v83, 0.03125
    %v112 = vmul.f32 %v92, 0.03125
    %v113 = vmul.f32 %v101, 0.03125
    %v114 = vmul.f32 %v110, 0.03125
    %v115 = vsub.f32 %v59, %v111
    %v116 = vsub.f32 %v60, %v112
    %v117 = vsub.f32 %v61, %v111
    %v118 = vsub.f32 %v62, %v112
    %v119 = vsub.f32 %v63, %v111
    %v120 = vsub.f32 %v64, %v112
    %v121 = vsub.f32 %v65, %v111
    %v122 = vsub.f32 %v66, %v112
    %v123 = vsub.f32 %v67, %v113
    %v124 = vsub.f32 %v68, %v114
    %v125 = vsub.f32 %v69, %v113
    %v126 = vsub.f32 %v70, %v114
    %v127 = vsub.f32 %v71, %v113
    %v128 = vsub.f32 %v72, %v114
    %v129 = vsub.f32 %v73, %v113
    %v130 = vsub.f32 %v74, %v114
    %v131 = vmul.f32 %v115, %v115
    %v132 = vmul.f32 %v116, %v116
    %v133 = vmul.f32 %v117, %v117
    %v134 = vmul.f32 %v118, %v118
    %v135 = vmul.f32 %v119, %v119
    %v136 = vmul.f32 %v120, %v120
    %v137 = vmul.f32 %v121, %v121
    %v138 = vmul.f32 %v122, %v122
    %v139 = vmul.f32 %v123, %v123
    %v140 = vmul.f32 %v124, %v124
    %v141 = vmul.f32 %v125, %v125
    %v142 = vmul.f32 %v126, %v126
    %v143 = vmul.f32 %v127, %v127
    %v144 = vmul.f32 %v128, %v128
    %v145 = vmul.f32 %v129, %v129
    %v146 = vmul.f32 %v130, %v130
    %v147 = vadd.f32 %v131, %v133
    %v148 = vadd.f32 %v147, %v135
    %v149 = vadd.f32 %v148, %v137
    %v150 = vrot.slane %v149, 4
    %v151 = vadd.f32 %v149, %v150
    %v152 = vrot.slane %v151, 2
    %v153 = vadd.f32 %v151, %v152
    %v154 = vrot.slane %v153, 1
    %v155 = vadd.f32 %v153, %v154
    %v156 = vadd.f32 %v132, %v134
    %v157 = vadd.f32 %v156, %v136
    %v158 = vadd.f32 %v157, %v138
    %v159 = vrot.slane %v158, 4
    %v160 = vadd.f32 %v158, %v159
    %v161 = vrot.slane %v160, 2
    %v162 = vadd.f32 %v160, %v161
    %v163 = vrot.slane %v162, 1
    %v164 = vadd.f32 %v162, %v163
    %v165 = vadd.f32 %v139, %v141
    %v166 = vadd.f32 %v165, %v143
    %v167 = vadd.f32 %v166, %v145
    %v168 = vrot.slane %v167, 4
    %v169 = vadd.f32 %v167, %v168
    %v170 = vrot.slane %v169, 2
    %v171 = vadd.f32 %v169, %v170
    %v172 = vrot.slane %v171, 1
    %v173 = vadd.f32 %v171, %v172
    %v174 = vadd.f32 %v140, %v142
    %v175 = vadd.f32 %v174, %v144
    %v176 = vadd.f32 %v175, %v146
    %v177 = vrot.slane %v176, 4
    %v178 = vadd.f32 %v176, %v177
    %v179 = vrot.slane %v178, 2
    %v180 = vadd.f32 %v178, %v179
    %v181 = vrot.slane %v180, 1
    %v182 = vadd.f32 %v180, %v181
    %v183 = vmul.f32 %v155, 0.03125
    %v184 = vmul.f32 %v164, 0.03125
    %v185 = vmul.f32 %v173, 0.03125
    %v186 = vmul.f32 %v182, 0.03125
    %v187 = vadd.f32 %v183, 1e-05
    %v188 = vadd.f32 %v184, 1e-05
    %v189 = vadd.f32 %v185, 1e-05
    %v190 = vadd.f32 %v186, 1e-05
    %v191 = vrsqrt.pop %v187
    %v192 = vmul.f32 %v191, %v187
    %v193 = vmul.f32 %v192, %v191
    %v194 = vmul.f32 0.5, %v193
    %v195 = vsub.f32 1.5, %v194
    %v196 = vmul.f32 %v191, %v195
    %vm197 = vweird.f32 %v187
    %vm198 = vweird.f32 %v191
    %vm199 = vmor %vm197, %vm198
    %v200 = vsel %vm199, %v191, %v196
    %v201 = vrsqrt.pop %v188
    %v202 = vmul.f32 %v201, %v188
    %v203 = vmul.f32 %v202, %v201
    %v204 = vmul.f32 0.5, %v203
    %v205 = vsub.f32 1.5, %v204
    %v206 = vmul.f32 %v201, %v205
    %vm207 = vweird.f32 %v188
    %vm208 = vweird.f32 %v201
    %vm209 = vmor %vm207, %vm208
    %v210 = vsel %vm209, %v201, %v206
    %v211 = vrsqrt.pop %v189
    %v212 = vmul.f32 %v211, %v189
    %v213 = vmul.f32 %v212, %v211
    %v214 = vmul.f32 0.5, %v213
    %v215 = vsub.f32 1.5, %v214
    %v216 = vmul.f32 %v211, %v215
    %vm217 = vweird.f32 %v189
    %vm218 = vweird.f32 %v211
    %vm219 = vmor %vm217, %vm218
    %v220 = vsel %vm219, %v211, %v216
    %v221 = vrsqrt.pop %v190
    %v222 = vmul.f32 %v221, %v190
    %v223 = vmul.f32 %v222, %v221
    %v224 = vmul.f32 0.5, %v223
    %v225 = vsub.f32 1.5, %v224
    %v226 = vmul.f32 %v221, %v225
    %vm227 = vweird.f32 %v190
    %vm228 = vweird.f32 %v221
    %vm229 = vmor %vm227, %vm228
    %v230 = vsel %vm229, %v221, %v226
    %v231 = vmul.f32 %v115, %v200
    %v232 = vmul.f32 %v116, %v210
    %v233 = vmul.f32 %v117, %v200
    %v234 = vmul.f32 %v118, %v210
    %v235 = vmul.f32 %v119, %v200
    %v236 = vmul.f32 %v120, %v210
    %v237 = vmul.f32 %v121, %v200
    %v238 = vmul.f32 %v122, %v210
    %v239 = vmul.f32 %v123, %v220
    %v240 = vmul.f32 %v124, %v230
    %v241 = vmul.f32 %v125, %v220
    %v242 = vmul.f32 %v126, %v230
    %v243 = vmul.f32 %v127, %v220
    %v244 = vmul.f32 %v128, %v230
    %v245 = vmul.f32 %v129, %v220
    %v246 = vmul.f32 %v130, %v230
    %v247 = vld [vmem:[#allocation2] sm:$0xff]
    %v248 = vld [vmem:[#allocation2 + $0x8] sm:$0xff]
    %v249 = vld [vmem:[#allocation2 + $0x10] sm:$0xff]
    %v250 = vld [vmem:[#allocation2 + $0x18] sm:$0xff]
    %v251 = vld [vmem:[#allocation2 + $0x20] sm:$0xff]
    %v252 = vld [vmem:[#allocation2 + $0x28] sm:$0xff]
    %v253 = vld [vmem:[#allocation2 + $0x30] sm:$0xff]
    %v254 = vld [vmem:[#allocation2 + $0x38] sm:$0xff]
    %v255 = vadd.f32 %v247, %v231
    %v256 = vadd.f32 %v248, %v233
    %v257 = vadd.f32 %v249, %v235
    %v258 = vadd.f32 %v250, %v237
    %v259 = vadd.f32 %v251, %v239
    %v260 = vadd.f32 %v252, %v241
    %v261 = vadd.f32 %v253, %v243
    %v262 = vadd.f32 %v254, %v245
    %v263 = vadd.f32 %v255, %v232
    %v264 = vadd.f32 %v256, %v234
    %v265 = vadd.f32 %v257, %v236
    %v266 = vadd.f32 %v258, %v238
    %v267 = vadd.f32 %v259, %v240
    %v268 = vadd.f32 %v260, %v242
    %v269 = vadd.f32 %v261, %v244
    %v270 = vadd.f32 %v262, %v246
    %271 = vst [vmem:[#allocation2] sm:$0xff] %v263
    %272 = vst [vmem:[#allocation2 + $0x8] sm:$0xff] %v264
    %273 = vst [vmem:[#allocation2 + $0x10] sm:$0xff] %v265
    %274 = vst [vmem:[#allocation2 + $0x18] sm:$0xff] %v266
    %275 = vst [vmem:[#allocation2 + $0x20] sm:$0xff] %v267
    %276 = vst [vmem:[#allocation2 + $0x28] sm:$0xff] %v268
    %277 = vst [vmem:[#allocation2 + $0x30] sm:$0xff] %v269
    %278 = vst [vmem:[#allocation2 + $0x38] sm:$0xff] %v270
    // Predicated region
    $region26: #{tpu_custom_call.1} parent=1 // pred_check
      %p279 = pneg %p47
    $region27: #{tpu_custom_call.1} parent=1 // pred_check_branch
      %281 = sbr.rel (%p279) target = $region29
    $region28: #{tpu_custom_call.1} parent=1 // pred_region
      %v282 = vld [vmem:[#allocation2] sm:$0xff]
      %v283 = vld [vmem:[#allocation2 + $0x8] sm:$0xff]
      %v284 = vld [vmem:[#allocation2 + $0x10] sm:$0xff]
      %v285 = vld [vmem:[#allocation2 + $0x18] sm:$0xff]
      %v286 = vld [vmem:[#allocation2 + $0x20] sm:$0xff]
      %v287 = vld [vmem:[#allocation2 + $0x28] sm:$0xff]
      %v288 = vld [vmem:[#allocation2 + $0x30] sm:$0xff]
      %v289 = vld [vmem:[#allocation2 + $0x38] sm:$0xff]
      %290 = vadd.xlane.f32.xlu0 %v282
      %v291 = vpop.xlane.xlu0 %290
      %292 = vadd.xlane.f32.xlu0 %v283
      %v293 = vpop.xlane.xlu0 %292
      %294 = vadd.xlane.f32.xlu0 %v284
      %v295 = vpop.xlane.xlu0 %294
      %296 = vadd.xlane.f32.xlu0 %v285
      %v297 = vpop.xlane.xlu0 %296
      %298 = vadd.xlane.f32.xlu0 %v286
      %v299 = vpop.xlane.xlu0 %298
      %300 = vadd.xlane.f32.xlu0 %v287
      %v301 = vpop.xlane.xlu0 %300
      %302 = vadd.xlane.f32.xlu0 %v288
      %v303 = vpop.xlane.xlu0 %302
      %304 = vadd.xlane.f32.xlu0 %v289
      %v305 = vpop.xlane.xlu0 %304
      %v306 = vld [vmem:[#allocation6] sm:$0xff]
      %v307 = vld [vmem:[#allocation6 + $0x8] sm:$0xff]
      %v308 = vld [vmem:[#allocation6 + $0x10] sm:$0xff]
      %v309 = vld [vmem:[#allocation6 + $0x18] sm:$0xff]
      %v310 = vld [vmem:[%s2] sm:$0x1]
      %v312 = vperm.slane %v310, 0
      %v322 = vlaneseq
      %v323 = vand.u32 %v322, 127
      %v324 = vperm.slane %v291, %v323
      %v325 = vadd.s32 %v323, 4294967288
      %v326 = vperm.slane %v293, %v325
      %vm327 = vcmask 130112
      %v328 = vsel %vm327, %v326, %v324
      %v329 = vadd.s32 %v323, 4294967280
      %v330 = vperm.slane %v295, %v329
      %vm331 = vcmask 195712
      %v332 = vsel %vm331, %v330, %v328
      %v333 = vadd.s32 %v323, 4294967272
      %v334 = vperm.slane %v297, %v333
      %vm335 = vcmask 261312
      %v336 = vsel %vm335, %v334, %v332
      %v337 = vperm.slane %v299, %v323
      %v338 = vperm.slane %v301, %v325
      %v339 = vsel %vm327, %v338, %v337
      %v340 = vperm.slane %v303, %v329
      %v341 = vsel %vm331, %v340, %v339
      %v342 = vperm.slane %v305, %v333
      %v343 = vsel %vm335, %v342, %v341
      %vm344 = vcmask 1041409
      %v345 = vsel %vm344, %v343, %v336
      %vm346 = vcmask 261120
      %v347 = vsel %vm346, %v345, 0
      %349 = vmatpush.msra.mxu0 0.0
      %350 = vmatpush.msra.mxu0 0.0
      %351 = vmatpush.msra.mxu0 0.0
      %352 = vmatpush.msra.mxu0 0.0
      %353 = vmatpush.msra.mxu0 0.0
      %354 = vmatpush.msra.mxu0 0.0
      %355 = vmatpush.msra.mxu0 0.0
      %356 = vmatpush.msra.mxu0 0.0
      %357 = vmatpush.msra.mxu0 0.0
      %358 = vmatpush.msra.mxu0 0.0
      %359 = vmatpush.msra.mxu0 0.0
      %360 = vmatpush.msra.mxu0 0.0
      %361 = vmatpush.msra.mxu0 %v309
      %362 = vmatpush.msra.mxu0 %v308
      %363 = vmatpush.msra.mxu0 %v307
      %364 = vmatpush.msra.mxu0 %v306
      %365 = vmatmul.f32.gmra.mxu0 %v347
      %v366 = vpop.f32.mrf.mxu0
      %v367 = vadd.f32 %v312, %v366
      %368 = vdwg.mxu0
      %369 = vst [vmem:[#allocation8] sm:$0x3] %v367
    $region29: #{tpu_custom_call.1} parent=1 // pred_fallthru
      _
    // Predicated region
    $region30: #{tpu_custom_call.1} parent=1 // pred_check
      _
    $region31: #{tpu_custom_call.1} parent=1 // pred_check_branch
      %371 = sbr.rel (0) target = $region33
    $region32: #{tpu_custom_call.1} parent=1 // pred_region
      %373 = vsyncadd [#allocation5], 0
      %s375 = sshll.u32 [#allocation8], 4
      %s376 = int_to_ptr.vmem [resolvable:$true] %s375
      %s377 = sshll.u32 %s3, 4
      %s378 = int_to_ptr.hbm [resolvable:$true] %s377
      %380 = dma.vmem_to_hbm [thread:$0]  %s376, 32, %s378, [#allocation5]
    $region33: #{tpu_custom_call.1} parent=1 // pred_fallthru
      _
    // Predicated region
    $region34: #{tpu_custom_call.1} parent=1 // pred_check
      _
    $region35: #{tpu_custom_call.1} parent=1 // pred_check_branch
      %382 = sbr.rel (0) target = $region37
    $region36: #{tpu_custom_call.1} parent=1 // pred_region
      %384 = dma.done [#allocation5], 32
    $region37: #{tpu_custom_call.1} parent=1 // pred_fallthru
      _
    %385 = vsyncpa [#allocation4], 1
    %386 = vsyncpa [#allocation7], 1
    %387 = vsyncpa [#allocation5], 1

</llo_original>
